<compile_context>
chip_gen: v7x
topology: tpu7x:2x2x1
jax: 0.10.0
libtpu: 0.0.40
codegen_flags: <defaults>
</compile_context>

<pallas_src>
import functools
import math

import jax
import jax.numpy as jnp
import numpy as np
from jax.experimental import pallas as pl
from jax.experimental.pallas import tpu as pltpu

_INV_SQRT2 = 1.0 / math.sqrt(2.0)
_EPS = 1e-12              # matches F.normalize eps
_MAX_TILE_ROWS = 1024     # packed rows per grid step (= 4096 batch items at PACK=4)


def _round_up(x, m):
    return (x + m - 1) // m * m


def _pack_factor(d):
    # Pack P batch items per sublane row so features span P*d lanes (128 when
    # d divides 128) -> lane-dense VPU/EUP work and unmasked 128-lane stores.
    if d <= 128 and 128 % d == 0:
        return 128 // d
    return 1


def _tile_rows(np_rows):
    # np_rows is always a multiple of 8 (wrapper pads N to pack*8).
    # Large tiles amortize per-step overhead; >=2 steps when possible so the
    # "parallel" grid axis can shard across v7x's two TensorCores.
    tn = min(_MAX_TILE_ROWS, _round_up(pl.cdiv(np_rows, 2), 8))
    return min(tn, np_rows)


def _gelu(x, approx):
    if approx:
        # tanh-approx GELU: transcendental goes to the (otherwise idle) EUP slot.
        return jax.nn.gelu(x, approximate=True)
    # Exact erf formulation, bit-near parity with torch nn.GELU() default.
    return 0.5 * x * (1.0 + jax.lax.erf(x * _INV_SQRT2))


# ---------------------------------------------------------------- kernels ---
def _sin_mlp_kernel(t_ref, sel_ref, phase_ref, w1_ref, b1_ref, w2_ref, b2_ref,
                    o_ref, *, gelu_approx):
    # t: [TN, P]; sel: [P, P*D] (freqs on the per-group diagonal);
    # phase: [1, P*D] (0 | pi/2 halves -> sin|cos without a concat);
    # w1: [P*D, P*4D] block-diag; w2: [P*4D, P*D] block-diag; biases tiled.
    tw = jnp.dot(t_ref[...], sel_ref[...], preferred_element_type=jnp.float32)
    feat = jnp.sin(tw + phase_ref[...])                                # [TN, P*D]
    h = jnp.dot(feat, w1_ref[...], preferred_element_type=jnp.float32) + b1_ref[...]
    h = _gelu(h, gelu_approx)                                          # [TN, P*4D]
    o_ref[...] = (jnp.dot(h, w2_ref[...], preferred_element_type=jnp.float32)
                  + b2_ref[...]).astype(o_ref.dtype)                   # [TN, P*D]


def _rbf_feat(t_block, sel, csc, gsum):
    # z = (t - c) / width, per lane group; sel already carries 1/width.
    z = jnp.dot(t_block, sel, preferred_element_type=jnp.float32) - csc
    ret = jnp.exp(-0.5 * z * z)
    # Per-lane-group L1 sum (ret > 0) via block-diag ones on the MXU; rows and
    # groups stay independent, so garbage rows in partial tiles cannot leak.
    denom = jnp.maximum(jnp.dot(ret, gsum, preferred_element_type=jnp.float32), _EPS)
    # approx=False: EUP vrcp's ~1e-3 error would break 1e-5 parity.
    return ret * pl.reciprocal(denom, approx=False) * 2.0 - 1.0


def _rbf_kernel(t_ref, sel_ref, csc_ref, gsum_ref, o_ref):
    o_ref[...] = _rbf_feat(t_ref[...], sel_ref[...], csc_ref[...],
                           gsum_ref[...]).astype(o_ref.dtype)


def _rbfnn_kernel(t_ref, sel_ref, csc_ref, gsum_ref, w1_ref, b1_ref, w2_ref,
                  b2_ref, o_ref, *, gelu_approx):
    feat = _rbf_feat(t_ref[...], sel_ref[...], csc_ref[...], gsum_ref[...])
    h = jnp.dot(feat, w1_ref[...], preferred_element_type=jnp.float32) + b1_ref[...]
    h = _gelu(h, gelu_approx)
    o_ref[...] = (jnp.dot(h, w2_ref[...], preferred_element_type=jnp.float32)
                  + b2_ref[...]).astype(o_ref.dtype)


# --------------------------------------------------------------- wrappers ---
def _resident_spec(shape):
    """Full-array block pinned in VMEM across the batch grid."""
    nd = len(shape)
    return pl.BlockSpec(shape, lambda i, _nd=nd: (0,) * _nd)


def _pack_time(t, pack):
    """Flatten t to [N], pad to pack*8, reshape to [N_pad/pack, pack]."""
    t_flat = jnp.reshape(t, (-1,)).astype(jnp.float32)
    n = t_flat.shape[0]
    n_pad = _round_up(n, pack * 8)   # full 8-sublane rows of `pack` items each
    if n_pad != n:
        t_flat = jnp.pad(t_flat, (0, n_pad - n))
    return t_flat.reshape(n_pad // pack, pack), n, n_pad


def _batched_call(kernel, t_packed, resident_args, out_lanes, flops, transc):
    np_rows, pack = t_packed.shape
    tn = _tile_rows(np_rows)
    in_specs = [pl.BlockSpec((tn, pack), lambda i: (i, 0))]
    in_specs += [_resident_spec(a.shape) for a in resident_args]
    bytes_accessed = 4 * (int(t_packed.size) + np_rows * out_lanes
                          + sum(int(a.size) for a in resident_args))
    return pl.pallas_call(
        kernel,
        out_shape=jax.ShapeDtypeStruct((np_rows, out_lanes), jnp.float32),
        grid=(pl.cdiv(np_rows, tn),),
        in_specs=in_specs,
        out_specs=pl.BlockSpec((tn, out_lanes), lambda i: (i, 0)),
        compiler_params=pltpu.CompilerParams(dimension_semantics=("parallel",)),
        cost_estimate=pl.CostEstimate(flops=int(flops),
                                      transcendentals=int(transc),
                                      bytes_accessed=int(bytes_accessed)),
    )(t_packed, *resident_args)


# ------------------------------------------------------------- module glue ---
class TimeEmbedLayer:
    """JAX/Pallas port of MolPilot's TimeEmbedLayer. Params stored in packed kernel layout."""

    def __init__(self, time_emb_mode, time_emb_dim, key, gelu_approx=False):
        self.time_emb_mode = time_emb_mode
        self.time_emb_dim = time_emb_dim
        self.gelu_approx = gelu_approx
        d = time_emb_dim

        if time_emb_mode == "simple":
            assert time_emb_dim == 1
            self.pack = 1
            self.params = {}
            return
        if time_emb_mode not in ("sin", "rbf", "rbfnn"):
            raise NotImplementedError(time_emb_mode)

        pack = _pack_factor(d)
        self.pack = pack
        eye = jnp.eye(pack, dtype=jnp.float32)
        p = {}

        if time_emb_mode == "sin":
            assert d >= 4 and d % 2 == 0, "sin mode needs even time_emb_dim >= 4"
            half = d // 2
            freqs = jnp.exp(jnp.arange(half, dtype=jnp.float32)
                            * (-math.log(10000.0) / (half - 1)))
            p["freqs"] = freqs.reshape(1, half)                       # reference layout
            freqs_full = jnp.concatenate([freqs, freqs])              # [D]
            phase = jnp.concatenate([jnp.zeros((half,), jnp.float32),
                                     jnp.full((half,), math.pi / 2, jnp.float32)])
            p["sel"] = jnp.kron(eye, freqs_full.reshape(1, d))        # [P, P*D]
            p["phase"] = jnp.tile(phase.reshape(1, d), (1, pack))     # [1, P*D]
        else:  # rbf / rbfnn
            centers = jnp.linspace(0.0, 1.0, d, dtype=jnp.float32)
            inv_width = float(d)                                      # 1 / ((1-0)/d)
            p["centers"] = centers.reshape(1, d)
            p["inv_width"] = inv_width
            p["sel"] = jnp.kron(eye, jnp.full((1, d), inv_width, jnp.float32))
            p["csc"] = jnp.tile((centers * inv_width).reshape(1, d), (1, pack))
            p["gsum"] = jnp.kron(eye, jnp.ones((d, d), jnp.float32))  # per-group L1 sum

        if time_emb_mode in ("sin", "rbfnn"):
            # Deterministic init mimicking torch.nn.Linear default U[-1/sqrt(fan_in), .].
            k1, k2, k3, k4 = jax.random.split(key, 4)
            lim1 = 1.0 / math.sqrt(d)
            lim2 = 1.0 / math.sqrt(4 * d)
            w1 = jax.random.uniform(k1, (d, 4 * d), jnp.float32, -lim1, lim1)
            b1 = jax.random.uniform(k2, (1, 4 * d), jnp.float32, -lim1, lim1)
            w2 = jax.random.uniform(k3, (4 * d, d), jnp.float32, -lim2, lim2)
            b2 = jax.random.uniform(k4, (1, d), jnp.float32, -lim2, lim2)
            p.update(w1=w1, b1=b1, w2=w2, b2=b2,                       # reference layout
                     w1_bd=jnp.kron(eye, w1), b1_t=jnp.tile(b1, (1, pack)),
                     w2_bd=jnp.kron(eye, w2), b2_t=jnp.tile(b2, (1, pack)))
        self.params = p

    def __call__(self, t):
        mode = self.time_emb_mode
        if mode == "simple":
            return t  # identity, pure glue: no kernel needed
        d, pack = self.time_emb_dim, self.pack
        p = self.params
        t_packed, n, n_pad = _pack_time(t, pack)
        out_lanes = pack * d

        if mode == "sin":
            kern = functools.partial(_sin_mlp_kernel, gelu_approx=self.gelu_approx)
            args = (p["sel"], p["phase"], p["w1_bd"], p["b1_t"], p["w2_bd"], p["b2_t"])
            flops = 2 * n_pad * d * (pack + 4 * d + 4 * d)
            transc = n_pad * 5 * d
        elif mode == "rbf":
            kern = _rbf_kernel
            args = (p["sel"], p["csc"], p["gsum"])
            flops = 2 * n_pad * d * (pack + pack * d)
            transc = n_pad * d
        else:  # rbfnn
            kern = functools.partial(_rbfnn_kernel, gelu_approx=self.gelu_approx)
            args = (p["sel"], p["csc"], p["gsum"],
                    p["w1_bd"], p["b1_t"], p["w2_bd"], p["b2_t"])
            flops = 2 * n_pad * d * (pack + pack * d + 4 * d + 4 * d)
            transc = n_pad * 6 * d

        out = _batched_call(kern, t_packed, args, out_lanes, flops, transc)
        out = out.reshape(n_pad, d)     # contiguous row-major -> free reshape
        if n_pad != n:
            out = out[:n]
        return out


# ------------------------------------------------------- pure-JAX reference ---
def _ref_sin(t, freqs2, w1, b1, w2, b2):
    emb = t.reshape(-1, 1) * freqs2
    emb = jnp.concatenate([jnp.sin(emb), jnp.cos(emb)], axis=-1)
    h = emb @ w1 + b1
    h = 0.5 * h * (1.0 + jax.lax.erf(h * _INV_SQRT2))
    return h @ w2 + b2


def _ref_rbf(t, centers2, inv_width):
    out = (t.reshape(-1, 1) - centers2) * inv_width
    ret = jnp.exp(-0.5 * out ** 2)
    denom = jnp.maximum(jnp.sum(jnp.abs(ret), axis=-1, keepdims=True), _EPS)
    return ret / denom * 2.0 - 1.0


def _ref_rbfnn(t, centers2, inv_width, w1, b1, w2, b2):
    feat = _ref_rbf(t, centers2, inv_width)
    h = feat @ w1 + b1
    h = 0.5 * h * (1.0 + jax.lax.erf(h * _INV_SQRT2))
    return h @ w2 + b2


if __name__ == "__main__":
    key = jax.random.PRNGKey(0)
    k_t, k_sin, k_rbfnn = jax.random.split(key, 3)

    D = 32  # time_emb_dim

    layer_sin = TimeEmbedLayer("sin", D, k_sin)
    layer_rbf = TimeEmbedLayer("rbf", D, k_sin)
    layer_rbfnn = TimeEmbedLayer("rbfnn", D, k_rbfnn)
    layer_rbfnn_fast = TimeEmbedLayer("rbfnn", D, k_rbfnn, gelu_approx=True)
    layer_simple = TimeEmbedLayer("simple", 1, key)

    # N=7: pack-padding + single tile; N=1200: multi-tile grid (2 parallel steps).
    for N in (7, 1200):
        t_sin = jax.random.uniform(k_t, (N,), jnp.float32)   # SinusoidalPosEmb expects [N]
        t_rbf = t_sin.reshape(N, 1)                           # RBF expects ndim >= 2

        out_sin = jax.block_until_ready(layer_sin(t_sin))
        ref_sin = _ref_sin(t_sin, layer_sin.params["freqs"], layer_sin.params["w1"],
                           layer_sin.params["b1"], layer_sin.params["w2"],
                           layer_sin.params["b2"])
        assert out_sin.shape == (N, D)
        np.testing.assert_allclose(np.asarray(out_sin), np.asarray(ref_sin),
                                   atol=1e-5, rtol=1e-5)

        out_rbf = jax.block_until_ready(layer_rbf(t_rbf))
        ref_rbf = _ref_rbf(t_rbf, layer_rbf.params["centers"], layer_rbf.params["inv_width"])
        assert out_rbf.shape == (N, D)
        np.testing.assert_allclose(np.asarray(out_rbf), np.asarray(ref_rbf),
                                   atol=1e-5, rtol=1e-5)

        out_rbfnn = jax.block_until_ready(layer_rbfnn(t_rbf))
        ref_rbfnn = _ref_rbfnn(t_rbf, layer_rbfnn.params["centers"],
                               layer_rbfnn.params["inv_width"],
                               layer_rbfnn.params["w1"], layer_rbfnn.params["b1"],
                               layer_rbfnn.params["w2"], layer_rbfnn.params["b2"])
        assert out_rbfnn.shape == (N, D)
        np.testing.assert_allclose(np.asarray(out_rbfnn), np.asarray(ref_rbfnn),
                                   atol=1e-5, rtol=1e-5)

        # Fast (tanh-GELU) path: smoke-test shape/finiteness only (not a parity mode).
        out_fast = jax.block_until_ready(layer_rbfnn_fast(t_rbf))
        assert out_fast.shape == (N, D)
        assert bool(np.all(np.isfinite(np.asarray(out_fast))))

        out_simple = jax.block_until_ready(layer_simple(t_rbf))
        assert out_simple.shape == (N, 1)

    print("KERNEL_OK")
</pallas_src>

<mosaic_0001>
module attributes {stable_mosaic.version = 11 : i64} {
  func.func @_sin_mlp_kernel(%arg0: i32, %arg1: memref<8x4xf32, #tpu.memory_space<vmem>>, %arg2: memref<4x128xf32, #tpu.memory_space<vmem>>, %arg3: memref<1x128xf32, #tpu.memory_space<vmem>>, %arg4: memref<128x512xf32, #tpu.memory_space<vmem>>, %arg5: memref<1x512xf32, #tpu.memory_space<vmem>>, %arg6: memref<512x128xf32, #tpu.memory_space<vmem>>, %arg7: memref<1x128xf32, #tpu.memory_space<vmem>>, %arg8: memref<8x128xf32, #tpu.memory_space<vmem>>) attributes {dimension_semantics = [#tpu.dimension_semantics<parallel>], iteration_bounds = array<i64: 1>, scalar_prefetch = 0 : i64, scratch_operands = 0 : i64, tpu.core_type = #tpu.core_type<tc>, window_params = [{transform_indices = @transform_0, window_bounds = array<i64: 8, 4>}, {pipeline_mode = #tpu.pipeline_mode<synchronous>, transform_indices = @transform_1, window_bounds = array<i64: 4, 128>}, {pipeline_mode = #tpu.pipeline_mode<synchronous>, transform_indices = @transform_2, window_bounds = array<i64: 1, 128>}, {pipeline_mode = #tpu.pipeline_mode<synchronous>, transform_indices = @transform_3, window_bounds = array<i64: 128, 512>}, {pipeline_mode = #tpu.pipeline_mode<synchronous>, transform_indices = @transform_4, window_bounds = array<i64: 1, 512>}, {pipeline_mode = #tpu.pipeline_mode<synchronous>, transform_indices = @transform_5, window_bounds = array<i64: 512, 128>}, {pipeline_mode = #tpu.pipeline_mode<synchronous>, transform_indices = @transform_6, window_bounds = array<i64: 1, 128>}, {transform_indices = @transform_7, window_bounds = array<i64: 8, 128>}]} {
    %c0 = arith.constant 0 : index
    %c0_0 = arith.constant 0 : index
    %0 = vector.load %arg1[%c0, %c0_0] : memref<8x4xf32, #tpu.memory_space<vmem>>, vector<8x4xf32>
    %c0_1 = arith.constant 0 : index
    %c0_2 = arith.constant 0 : index
    %1 = vector.load %arg2[%c0_1, %c0_2] : memref<4x128xf32, #tpu.memory_space<vmem>>, vector<4x128xf32>
    %cst = arith.constant dense<0.000000e+00> : vector<8x128xf32>
    %2 = tpu.matmul %0, %1, %cst {dimension_numbers = #tpu.dot_dimension_numbers<[1], [0], [0], [1], [0, 0, 1, 1], [], []>} : vector<8x4xf32>, vector<4x128xf32>, vector<8x128xf32> -> vector<8x128xf32>
    %c0_3 = arith.constant 0 : index
    %c0_4 = arith.constant 0 : index
    %3 = vector.load %arg3[%c0_3, %c0_4] : memref<1x128xf32, #tpu.memory_space<vmem>>, vector<1x128xf32>
    %4 = vector.broadcast %3 : vector<1x128xf32> to vector<8x128xf32>
    %5 = arith.addf %2, %4 : vector<8x128xf32>
    %6 = math.sin %5 : vector<8x128xf32>
    %c0_5 = arith.constant 0 : index
    %c0_6 = arith.constant 0 : index
    %7 = vector.load %arg4[%c0_5, %c0_6] : memref<128x512xf32, #tpu.memory_space<vmem>>, vector<128x512xf32>
    %cst_7 = arith.constant dense<0.000000e+00> : vector<8x512xf32>
    %8 = tpu.matmul %6, %7, %cst_7 {dimension_numbers = #tpu.dot_dimension_numbers<[1], [0], [0], [1], [0, 0, 1, 1], [], []>} : vector<8x128xf32>, vector<128x512xf32>, vector<8x512xf32> -> vector<8x512xf32>
    %c0_8 = arith.constant 0 : index
    %c0_9 = arith.constant 0 : index
    %9 = vector.load %arg5[%c0_8, %c0_9] : memref<1x512xf32, #tpu.memory_space<vmem>>, vector<1x512xf32>
    %10 = vector.broadcast %9 : vector<1x512xf32> to vector<8x512xf32>
    %11 = arith.addf %8, %10 : vector<8x512xf32>
    %cst_10 = arith.constant 5.000000e-01 : f32
    %12 = vector.broadcast %cst_10 : f32 to vector<8x512xf32>
    %13 = arith.mulf %12, %11 : vector<8x512xf32>
    %cst_11 = arith.constant 0.707106769 : f32
    %14 = vector.broadcast %cst_11 : f32 to vector<8x512xf32>
    %15 = arith.mulf %11, %14 : vector<8x512xf32>
    %16 = math.erf %15 : vector<8x512xf32>
    %cst_12 = arith.constant 1.000000e+00 : f32
    %17 = vector.broadcast %cst_12 : f32 to vector<8x512xf32>
    %18 = arith.addf %17, %16 : vector<8x512xf32>
    %19 = arith.mulf %13, %18 : vector<8x512xf32>
    %c0_13 = arith.constant 0 : index
    %c0_14 = arith.constant 0 : index
    %20 = vector.load %arg6[%c0_13, %c0_14] : memref<512x128xf32, #tpu.memory_space<vmem>>, vector<512x128xf32>
    %cst_15 = arith.constant dense<0.000000e+00> : vector<8x128xf32>
    %21 = tpu.matmul %19, %20, %cst_15 {dimension_numbers = #tpu.dot_dimension_numbers<[1], [0], [0], [1], [0, 0, 1, 1], [], []>} : vector<8x512xf32>, vector<512x128xf32>, vector<8x128xf32> -> vector<8x128xf32>
    %c0_16 = arith.constant 0 : index
    %c0_17 = arith.constant 0 : index
    %22 = vector.load %arg7[%c0_16, %c0_17] : memref<1x128xf32, #tpu.memory_space<vmem>>, vector<1x128xf32>
    %23 = vector.broadcast %22 : vector<1x128xf32> to vector<8x128xf32>
    %24 = arith.addf %21, %23 : vector<8x128xf32>
    %c0_18 = arith.constant 0 : index
    %c0_19 = arith.constant 0 : index
    %25 = vector.load %arg8[%c0_18, %c0_19] : memref<8x128xf32, #tpu.memory_space<vmem>>, vector<8x128xf32>
    tpu.vector_store %arg8[%c0_18, %c0_19], %24 {strides = array<i32>} : memref<8x128xf32, #tpu.memory_space<vmem>>, vector<8x128xf32>,
    return
  }
  func.func @transform_0(%arg0: i32) -> (i32, i32) {
    %c0_i32 = arith.constant 0 : i32
    %c0_i32_0 = arith.constant 0 : i32
    return %arg0, %c0_i32 : i32, i32
  }
  func.func @transform_1(%arg0: i32) -> (i32, i32) {
    %c0_i32 = arith.constant 0 : i32
    %c0_i32_0 = arith.constant 0 : i32
    %c0_i32_1 = arith.constant 0 : i32
    return %c0_i32, %c0_i32_0 : i32, i32
  }
  func.func @transform_2(%arg0: i32) -> (i32, i32) {
    %c0_i32 = arith.constant 0 : i32
    %c0_i32_0 = arith.constant 0 : i32
    %c0_i32_1 = arith.constant 0 : i32
    return %c0_i32, %c0_i32_0 : i32, i32
  }
  func.func @transform_3(%arg0: i32) -> (i32, i32) {
    %c0_i32 = arith.constant 0 : i32
    %c0_i32_0 = arith.constant 0 : i32
    %c0_i32_1 = arith.constant 0 : i32
    return %c0_i32, %c0_i32_0 : i32, i32
  }
  func.func @transform_4(%arg0: i32) -> (i32, i32) {
    %c0_i32 = arith.constant 0 : i32
    %c0_i32_0 = arith.constant 0 : i32
    %c0_i32_1 = arith.constant 0 : i32
    return %c0_i32, %c0_i32_0 : i32, i32
  }
  func.func @transform_5(%arg0: i32) -> (i32, i32) {
    %c0_i32 = arith.constant 0 : i32
    %c0_i32_0 = arith.constant 0 : i32
    %c0_i32_1 = arith.constant 0 : i32
    return %c0_i32, %c0_i32_0 : i32, i32
  }
  func.func @transform_6(%arg0: i32) -> (i32, i32) {
    %c0_i32 = arith.constant 0 : i32
    %c0_i32_0 = arith.constant 0 : i32
    %c0_i32_1 = arith.constant 0 : i32
    return %c0_i32, %c0_i32_0 : i32, i32
  }
  func.func @transform_7(%arg0: i32) -> (i32, i32) {
    %c0_i32 = arith.constant 0 : i32
    %c0_i32_0 = arith.constant 0 : i32
    return %arg0, %c0_i32 : i32, i32
  }
}

</mosaic_0001>

<llo_original>
// kernel: tpu_custom_call.1
$region0: #{tpu_custom_call.1}
  #allocation0 [shape = 'u32[]', space=smem, size = 0x4, offset = 0x4, fixed_abs, tag = 'smem constant byte address 0x4 - core index']
  #allocation1 [shape = 'u32[144,128]{1,0:T(1,128)}', space=vmem, size = 0x12000, scoped, tag = 'internal scratch']
  %s0 = inlined_call_operand.vmem [shape: f32[8,4], index: 0, kind: input, shape index: {}]
  %s1 = inlined_call_operand.vmem [shape: f32[4,128], index: 1, kind: input, shape index: {}]
  %s2 = inlined_call_operand.vmem [shape: f32[1,128], index: 2, kind: input, shape index: {}]
  %s3 = inlined_call_operand.hbm [shape: f32[128,512], index: 3, kind: input, shape index: {}]
  %s4 = inlined_call_operand.vmem [shape: f32[1,512], index: 4, kind: input, shape index: {}]
  %s5 = inlined_call_operand.hbm [shape: f32[512,128], index: 5, kind: input, shape index: {}]
  %s6 = inlined_call_operand.vmem [shape: f32[1,128], index: 6, kind: input, shape index: {}]
  %s7 = inlined_call_operand.hbm [shape: f32[8,128], index: 7, kind: output, shape index: {}]
  %s8 = sld [smem:[#allocation0]]
  $region46: #{tpu_custom_call.1} parent=0
    _
  %s10 = ssub.s32 1, %s8
  %s11 = scalar_select 0, %s10, %s8
  $region1: #{tpu_custom_call.1} parent=0
    #allocation2 [shape = 'u8[262144]{0}', space=vmem, size = 0x40000, scoped, tag = 'input window, operand 3, single buffered']
    #allocation3 [shape = 's32[1]{0}', space=sflag, size = 0x4, scoped, tag = 'scoped memory for tpu_custom_call.1']
    #allocation4 [shape = 's32[1]{0}', space=sflag, size = 0x4, scoped, tag = 'scoped memory for tpu_custom_call.1']
    #allocation5 [shape = 'u8[262144]{0}', space=vmem, size = 0x40000, scoped, tag = 'input window, operand 5, single buffered']
    #allocation6 [shape = 's32[1]{0}', space=sflag, size = 0x4, scoped, tag = 'scoped memory for tpu_custom_call.1']
    #allocation7 [shape = 'u8[4096]{0}', space=vmem, size = 0x1000, scoped, tag = 'output window, operand 0, single buffered']
    %12 = vsyncpa [#allocation3], 0
    %13 = vsyncpa [#allocation6], 0
    %14 = vsyncpa [#allocation4], 0
    // Predicated region
    $region2: #{tpu_custom_call.1} parent=1 // pred_check
      _
    $region3: #{tpu_custom_call.1} parent=1 // pred_check_branch
      %16 = sbr.rel (0) target = $region5
    $region4: #{tpu_custom_call.1} parent=1 // pred_region
      _
    $region5: #{tpu_custom_call.1} parent=1 // pred_fallthru
      _
    // Predicated region
    $region6: #{tpu_custom_call.1} parent=1 // pred_check
      _
    $region7: #{tpu_custom_call.1} parent=1 // pred_check_branch
      %18 = sbr.rel (0) target = $region9
    $region8: #{tpu_custom_call.1} parent=1 // pred_region
      _
    $region9: #{tpu_custom_call.1} parent=1 // pred_fallthru
      _
    // Predicated region
    $region10: #{tpu_custom_call.1} parent=1 // pred_check
      _
    $region11: #{tpu_custom_call.1} parent=1 // pred_check_branch
      %20 = sbr.rel (0) target = $region13
    $region12: #{tpu_custom_call.1} parent=1 // pred_region
      _
    $region13: #{tpu_custom_call.1} parent=1 // pred_fallthru
      _
    // Predicated region
    $region14: #{tpu_custom_call.1} parent=1 // pred_check
      _
    $region15: #{tpu_custom_call.1} parent=1 // pred_check_branch
      %22 = sbr.rel (0) target = $region17
    $region16: #{tpu_custom_call.1} parent=1 // pred_region
      %s24 = ssub.s32 8192, 8192
      %25 = vsyncadd [#allocation3], %s24
      %s26 = sshll.u32 [#allocation2], 4
      %s27 = int_to_ptr.vmem [resolvable:$true] %s26
      %32 = dma.hbm_to_vmem [thread:$0]  %s3, 8192, %s27, [#allocation3], 512, 512, 32
    $region17: #{tpu_custom_call.1} parent=1 // pred_fallthru
      _
    // Predicated region
    $region18: #{tpu_custom_call.1} parent=1 // pred_check
      _
    $region19: #{tpu_custom_call.1} parent=1 // pred_check_branch
      %34 = sbr.rel (0) target = $region21
    $region20: #{tpu_custom_call.1} parent=1 // pred_region
      _
    $region21: #{tpu_custom_call.1} parent=1 // pred_fallthru
      _
    // Predicated region
    $region22: #{tpu_custom_call.1} parent=1 // pred_check
      _
    $region23: #{tpu_custom_call.1} parent=1 // pred_check_branch
      %36 = sbr.rel (0) target = $region25
    $region24: #{tpu_custom_call.1} parent=1 // pred_region
      %s38 = ssub.s32 8192, 8192
      %39 = vsyncadd [#allocation6], %s38
      %s40 = sshll.u32 [#allocation5], 4
      %s41 = int_to_ptr.vmem [resolvable:$true] %s40
      %46 = dma.hbm_to_vmem [thread:$0]  %s5, 8192, %s41, [#allocation6], 128, 128, 8
    $region25: #{tpu_custom_call.1} parent=1 // pred_fallthru
      _
    // Predicated region
    $region26: #{tpu_custom_call.1} parent=1 // pred_check
      _
    $region27: #{tpu_custom_call.1} parent=1 // pred_check_branch
      %48 = sbr.rel (0) target = $region29
    $region28: #{tpu_custom_call.1} parent=1 // pred_region
      _
    $region29: #{tpu_custom_call.1} parent=1 // pred_fallthru
      _
    // Predicated region
    $region30: #{tpu_custom_call.1} parent=1 // pred_check
      _
    $region31: #{tpu_custom_call.1} parent=1 // pred_check_branch
      %50 = sbr.rel (0) target = $region33
    $region32: #{tpu_custom_call.1} parent=1 // pred_region
      %51 = dma.done [#allocation3], 8192
    $region33: #{tpu_custom_call.1} parent=1 // pred_fallthru
      _
    // Predicated region
    $region34: #{tpu_custom_call.1} parent=1 // pred_check
      _
    $region35: #{tpu_custom_call.1} parent=1 // pred_check_branch
      %53 = sbr.rel (0) target = $region37
    $region36: #{tpu_custom_call.1} parent=1 // pred_region
      %54 = dma.done [#allocation6], 8192
    $region37: #{tpu_custom_call.1} parent=1 // pred_fallthru
      _
    %v55 = vld [vmem:[%s0] sm:$0xff]
    %v56 = vld [vmem:[%s1] sm:$0xf]
    %v57 = vld [vmem:[%s2] sm:$0x1]
    %v59 = vlaneseq
    %v60 = vshrl.u32 %v59, 7
    %v61 = vsub.s32 0, %v60
    %v62 = vrot.slane %v57, %v61
    %vm64 = vcmask 31744
    %v66 = vsel %vm64, %v55, 0
    %vm68 = vcmask 1043456
    %v70 = vsel %vm68, %v56, 0
    %72 = vmatprep.subr.mxu0 0.0
    %73 = vmatpush1.msra.mxu0 %v70
    %74 = vmatprep.subr.mxu0 0.0
    %75 = vmatpush1.msra.mxu0 0.0
    %76 = vmatprep.subr.mxu0 0.0
    %77 = vmatpush1.msra.mxu0 0.0
    %78 = vmatprep.subr.mxu0 0.0
    %79 = vmatpush1.msra.mxu0 0.0
    %80 = vmatprep.subr.mxu0 0.0
    %81 = vmatpush1.msra.mxu0 0.0
    %82 = vmatprep.subr.mxu0 0.0
    %83 = vmatpush1.msra.mxu0 0.0
    %84 = vmatprep.subr.mxu0 0.0
    %85 = vmatpush1.msra.mxu0 0.0
    %86 = vmatprep.subr.mxu0 0.0
    %87 = vmatpush1.msra.mxu0 0.0
    %88 = vmatprep.subr.mxu0 0.0
    %89 = vmatpush1.msra.mxu0 0.0
    %90 = vmatprep.subr.mxu0 0.0
    %91 = vmatpush1.msra.mxu0 0.0
    %92 = vmatprep.subr.mxu0 0.0
    %93 = vmatpush1.msra.mxu0 0.0
    %94 = vmatprep.subr.mxu0 0.0
    %95 = vmatpush1.msra.mxu0 0.0
    %96 = vmatprep.subr.mxu0 0.0
    %97 = vmatpush1.msra.mxu0 0.0
    %98 = vmatprep.subr.mxu0 0.0
    %99 = vmatpush1.msra.mxu0 0.0
    %100 = vmatprep.subr.mxu0 0.0
    %101 = vmatpush1.msra.mxu0 0.0
    %102 = vmatprep.subr.mxu0 0.0
    %103 = vmatpush1.msra.mxu0 0.0
    %104 = vmatprep.subr.mxu0 0.0
    %105 = vmatpush1.msra.mxu0 0.0
    %106 = vmatprep.subr.mxu0 0.0
    %107 = vmatpush1.msra.mxu0 0.0
    %108 = vmatprep.subr.mxu0 0.0
    %109 = vmatpush1.msra.mxu0 0.0
    %110 = vmatprep.subr.mxu0 0.0
    %111 = vmatpush1.msra.mxu0 0.0
    %112 = vmatprep.subr.mxu0 0.0
    %113 = vmatpush1.msra.mxu0 0.0
    %114 = vmatprep.subr.mxu0 0.0
    %115 = vmatpush1.msra.mxu0 0.0
    %116 = vmatprep.subr.mxu0 0.0
    %117 = vmatpush1.msra.mxu0 0.0
    %118 = vmatprep.subr.mxu0 0.0
    %119 = vmatpush1.msra.mxu0 0.0
    %120 = vmatprep.subr.mxu0 0.0
    %121 = vmatpush1.msra.mxu0 0.0
    %122 = vmatprep.subr.mxu0 0.0
    %123 = vmatpush1.msra.mxu0 0.0
    %124 = vmatprep.subr.mxu0 0.0
    %125 = vmatpush1.msra.mxu0 0.0
    %126 = vmatprep.subr.mxu0 0.0
    %127 = vmatpush1.msra.mxu0 0.0
    %128 = vmatprep.subr.mxu0 0.0
    %129 = vmatpush1.msra.mxu0 0.0
    %130 = vmatprep.subr.mxu0 0.0
    %131 = vmatpush1.msra.mxu0 0.0
    %132 = vmatprep.subr.mxu0 0.0
    %133 = vmatpush1.msra.mxu0 0.0
    %134 = vmatprep.subr.mxu0 0.0
    %135 = vmatpush1.msra.mxu0 0.0
    %136 = vmatprep.mubr.f32.mxu0 0.0
    %137 = vmatmul.mubr.f32.gmra.mrb[0].mxu0 %v66
    %v138 = vpop.f32.mrb[0].mxu0
    %v139 = vadd.f32 %v62, %v138
    %v140 = vpop.f32.mrb[0].mxu0
    %141 = vdwg.mxu0
    %v142 = vand.u32 2147483647, %v139
    %vm143 = vcmp.le.f32.partialorder %v142, 0.7853982
    %vm144 = vcmp.lt.s32.totalorder %v139, 0
    %v145 = vand.u32 %v139, 2139095040
    %v146 = vshrl.u32 %v145, 23
    %v147 = vsub.s32 %v146, 127
    %v148 = vand.u32 2147483647, %v139
    %v149 = vand.u32 %v148, 8388607
    %v150 = vor.u32 %v149, 8388608
    %v151 = vsub.s32 0, %v150
    %v152 = vadd.s32 %v147, 1
    %vm153 = vcmp.gt.s32.totalorder %v152, 0
    %v154 = vsel %vm153, %v152, 0
    %v155 = vshrl.u32 %v154, 5
    %v156 = vand.u32 %v154, 31
    %v157 = vsub.s32 32, %v156
    %v158 = vshrl.u32 683565275, %v157
    %v159 = vshll.u32 683565275, %v156
    %v160 = vshrl.u32 2475754826, %v157
    %v161 = vor.u32 %v159, %v160
    %v162 = vshll.u32 2475754826, %v156
    %v163 = vshrl.u32 2131351028, %v157
    %v164 = vor.u32 %v162, %v163
    %v165 = vshll.u32 2131351028, %v156
    %v166 = vshrl.u32 2102212464, %v157
    %v167 = vor.u32 %v165, %v166
    %v168 = vshll.u32 2102212464, %v156
    %v169 = vshrl.u32 920167782, %v157
    %v170 = vor.u32 %v168, %v169
    %v171 = vshll.u32 920167782, %v156
    %v172 = vshrl.u32 1326507024, %v157
    %v173 = vor.u32 %v171, %v172
    %vm174 = vcmp.lt.s32.totalorder %v155, 1
    %vm175 = vcmp.lt.s32.totalorder %v155, 2
    %vm176 = vcmp.lt.s32.totalorder %v155, 3
    %vm177 = vcmp.lt.s32.totalorder %v155, 4
    %v178 = vsel %vm174, %v158, %v161
    %v179 = vsel %vm177, %v167, 2102212464
    %v180 = vsel %vm176, %v164, %v179
    %v181 = vsel %vm175, %v178, %v180
    %v182 = vsel %vm174, %v161, %v164
    %v183 = vsel %vm177, %v170, 920167782
    %v184 = vsel %vm176, %v167, %v183
    %v185 = vsel %vm175, %v182, %v184
    %v186 = vsel %vm174, %v164, %v167
    %v187 = vsel %vm177, %v173, 1326507024
    %v188 = vsel %vm176, %v170, %v187
    %v189 = vsel %vm175, %v186, %v188
    %v190 = vshll.u32 %v150, 8
    %v191 = vmul.u32.u64.compose %v190, %v189
    %v192 = vextract.low.u32 %v191
    %v193 = vextract.high.u32 %v191
    %v194 = vmul.u32.u64.compose %v190, %v185
    %v195 = vextract.low.u32 %v194
    %v196 = vextract.high.u32 %v194
    %v197 = vmul.u32 %v190, %v181
    %v198 = vadd.s32 %v193, %v195
    %vm199 = vc.u32 %v193, %v195
    %v200 = vadd.s32 %v196, 1
    %v201 = vsel %vm199, %v200, %v196
    %v202 = vadd.s32 %v197, %v201
    %v203 = vadd.s32 %v202, 536870912
    %v204 = vshrl.u32 %v203, 30
    %v205 = vshll.u32 %v204, 30
    %v206 = vsub.s32 %v202, %v205
    %vm207 = vcmp.lt.s32.totalorder %v206, 0
    %v208 = vsub.s32 0, %v206
    %v209 = vsel %vm207, %v208, %v206
    %v210 = vclz %v209
    %v211 = vsub.s32 %v210, 2
    %vm212 = vcmp.gt.s32.totalorder 0, %v211
    %v213 = vsel %vm212, 0, %v211
    %v214 = vsub.s32 32, %v213
    %v215 = vshll.u32 %v206, %v213
    %v216 = vshrl.u32 %v198, %v214
    %v217 = vor.u32 %v215, %v216
    %v218 = vsub.s32 4294967266, %v213
    %v219 = vadd.s32 %v218, 127
    %v220 = vshll.u32 %v219, 23
    %v221 = vor.u32 4788187, %v220
    %v222 = vand.u32 2147483647, %v221
    %v224 = vcvt.s32.f32 %v217
    %v225 = vmul.f32 %v224, %v222
    %v226 = vxor.u32 %v225, 2147483648
    %v227 = vsel %vm144, %v226, %v225
    %v228 = vsub.s32 4, %v204
    %v229 = vsel %vm144, %v228, %v204
    %v230 = vsel %vm143, %v139, %v227
    %v231 = vsel %vm143, 0, %v229
    %v232 = vcosq.f32.pop %v230
    %v233 = vsinq.f32.pop %v230
    %vm234 = vweird.f32 %v139
    %v235 = vadd.s32 %v231, 3
    %v236 = vand.u32 %v235, 3
    %vm237 = vcmp.lt.s32.totalorder %v236, 2
    %vm238 = vcmp.eq.s32.totalorder %v236, 0
    %v239 = vxor.u32 %v233, 2147483648
    %v240 = vsel %vm238, %v232, %v239
    %vm241 = vcmp.eq.s32.totalorder %v236, 2
    %v242 = vxor.u32 %v232, 2147483648
    %v243 = vsel %vm241, %v242, %v233
    %v244 = vsel %vm237, %v240, %v243
    %v245 = vsel %vm234, nan, %v244
    %v246 = vld [vmem:[#allocation2] sm:$0xff]
    %v247 = vld [vmem:[#allocation2 + $0x8] sm:$0xff]
    %v248 = vld [vmem:[#allocation2 + $0x10] sm:$0xff]
    %v249 = vld [vmem:[#allocation2 + $0x18] sm:$0xff]
    %v250 = vld [vmem:[#allocation2 + $0x20] sm:$0xff]
    %v251 = vld [vmem:[#allocation2 + $0x28] sm:$0xff]
    %v252 = vld [vmem:[#allocation2 + $0x30] sm:$0xff]
    %v253 = vld [vmem:[#allocation2 + $0x38] sm:$0xff]
    %v254 = vld [vmem:[#allocation2 + $0x40] sm:$0xff]
    %v255 = vld [vmem:[#allocation2 + $0x48] sm:$0xff]
    %v256 = vld [vmem:[#allocation2 + $0x50] sm:$0xff]
    %v257 = vld [vmem:[#allocation2 + $0x58] sm:$0xff]
    %v258 = vld [vmem:[#allocation2 + $0x60] sm:$0xff]
    %v259 = vld [vmem:[#allocation2 + $0x68] sm:$0xff]
    %v260 = vld [vmem:[#allocation2 + $0x70] sm:$0xff]
    %v261 = vld [vmem:[#allocation2 + $0x78] sm:$0xff]
    %v262 = vld [vmem:[#allocation2 + $0x80] sm:$0xff]
    %v263 = vld [vmem:[#allocation2 + $0x88] sm:$0xff]
    %v264 = vld [vmem:[#allocation2 + $0x90] sm:$0xff]
    %v265 = vld [vmem:[#allocation2 + $0x98] sm:$0xff]
    %v266 = vld [vmem:[#allocation2 + $0xa0] sm:$0xff]
    %v267 = vld [vmem:[#allocation2 + $0xa8] sm:$0xff]
    %v268 = vld [vmem:[#allocation2 + $0xb0] sm:$0xff]
    %v269 = vld [vmem:[#allocation2 + $0xb8] sm:$0xff]
    %v270 = vld [vmem:[#allocation2 + $0xc0] sm:$0xff]
    %v271 = vld [vmem:[#allocation2 + $0xc8] sm:$0xff]
    %v272 = vld [vmem:[#allocation2 + $0xd0] sm:$0xff]
    %v273 = vld [vmem:[#allocation2 + $0xd8] sm:$0xff]
    %v274 = vld [vmem:[#allocation2 + $0xe0] sm:$0xff]
    %v275 = vld [vmem:[#allocation2 + $0xe8] sm:$0xff]
    %v276 = vld [vmem:[#allocation2 + $0xf0] sm:$0xff]
    %v277 = vld [vmem:[#allocation2 + $0xf8] sm:$0xff]
    %v278 = vld [vmem:[#allocation2 + $0x100] sm:$0xff]
    %v279 = vld [vmem:[#allocation2 + $0x108] sm:$0xff]
    %v280 = vld [vmem:[#allocation2 + $0x110] sm:$0xff]
    %v281 = vld [vmem:[#allocation2 + $0x118] sm:$0xff]
    %v282 = vld [vmem:[#allocation2 + $0x120] sm:$0xff]
    %v283 = vld [vmem:[#allocation2 + $0x128] sm:$0xff]
    %v284 = vld [vmem:[#allocation2 + $0x130] sm:$0xff]
    %v285 = vld [vmem:[#allocation2 + $0x138] sm:$0xff]
    %v286 = vld [vmem:[#allocation2 + $0x140] sm:$0xff]
    %v287 = vld [vmem:[#allocation2 + $0x148] sm:$0xff]
    %v288 = vld [vmem:[#allocation2 + $0x150] sm:$0xff]
    %v289 = vld [vmem:[#allocation2 + $0x158] sm:$0xff]
    %v290 = vld [vmem:[#allocation2 + $0x160] sm:$0xff]
    %v291 = vld [vmem:[#allocation2 + $0x168] sm:$0xff]
    %v292 = vld [vmem:[#allocation2 + $0x170] sm:$0xff]
    %v293 = vld [vmem:[#allocation2 + $0x178] sm:$0xff]
    %v294 = vld [vmem:[#allocation2 + $0x180] sm:$0xff]
    %v295 = vld [vmem:[#allocation2 + $0x188] sm:$0xff]
    %v296 = vld [vmem:[#allocation2 + $0x190] sm:$0xff]
    %v297 = vld [vmem:[#allocation2 + $0x198] sm:$0xff]
    %v298 = vld [vmem:[#allocation2 + $0x1a0] sm:$0xff]
    %v299 = vld [vmem:[#allocation2 + $0x1a8] sm:$0xff]
    %v300 = vld [vmem:[#allocation2 + $0x1b0] sm:$0xff]
    %v301 = vld [vmem:[#allocation2 + $0x1b8] sm:$0xff]
    %v302 = vld [vmem:[#allocation2 + $0x1c0] sm:$0xff]
    %v303 = vld [vmem:[#allocation2 + $0x1c8] sm:$0xff]
    %v304 = vld [vmem:[#allocation2 + $0x1d0] sm:$0xff]
    %v305 = vld [vmem:[#allocation2 + $0x1d8] sm:$0xff]
    %v306 = vld [vmem:[#allocation2 + $0x1e0] sm:$0xff]
    %v307 = vld [vmem:[#allocation2 + $0x1e8] sm:$0xff]
    %v308 = vld [vmem:[#allocation2 + $0x1f0] sm:$0xff]
    %v309 = vld [vmem:[#allocation2 + $0x1f8] sm:$0xff]
    %v310 = vld [vmem:[%s4] sm:$0xf]
    %v312 = vlaneseq
    %v313 = vshrl.u32 %v312, 7
    %v314 = vsub.s32 0, %v313
    %v315 = vrot.slane %v310, %v314
    %v316 = vlaneseq
    %v317 = vshrl.u32 %v316, 7
    %v318 = vsub.s32 1, %v317
    %v319 = vrot.slane %v310, %v318
    %v320 = vlaneseq
    %v321 = vshrl.u32 %v320, 7
    %v322 = vsub.s32 2, %v321
    %v323 = vrot.slane %v310, %v322
    %v324 = vlaneseq
    %v325 = vshrl.u32 %v324, 7
    %v326 = vsub.s32 3, %v325
    %v327 = vrot.slane %v310, %v326
    %332 = vmatprep.subr.mxu0 %v247
    %333 = vmatpush1.msra.mxu0 %v246
    %334 = vmatprep.subr.mxu0 %v251
    %335 = vmatpush1.msra.mxu0 %v250
    %336 = vmatprep.subr.mxu0 %v255
    %337 = vmatpush1.msra.mxu0 %v254
    %338 = vmatprep.subr.mxu0 %v259
    %339 = vmatpush1.msra.mxu0 %v258
    %340 = vmatprep.subr.mxu0 %v263
    %341 = vmatpush1.msra.mxu0 %v262
    %342 = vmatprep.subr.mxu0 %v267
    %343 = vmatpush1.msra.mxu0 %v266
    %344 = vmatprep.subr.mxu0 %v271
    %345 = vmatpush1.msra.mxu0 %v270
    %346 = vmatprep.subr.mxu0 %v275
    %347 = vmatpush1.msra.mxu0 %v274
    %348 = vmatprep.subr.mxu0 %v279
    %349 = vmatpush1.msra.mxu0 %v278
    %350 = vmatprep.subr.mxu0 %v283
    %351 = vmatpush1.msra.mxu0 %v282
    %352 = vmatprep.subr.mxu0 %v287
    %353 = vmatpush1.msra.mxu0 %v286
    %354 = vmatprep.subr.mxu0 %v291
    %355 = vmatpush1.msra.mxu0 %v290
    %356 = vmatprep.subr.mxu0 %v295
    %357 = vmatpush1.msra.mxu0 %v294
    %358 = vmatprep.subr.mxu0 %v299
    %359 = vmatpush1.msra.mxu0 %v298
    %360 = vmatprep.subr.mxu0 %v303
    %361 = vmatpush1.msra.mxu0 %v302
    %362 = vmatprep.subr.mxu0 %v307
    %363 = vmatpush1.msra.mxu0 %v306
    %364 = vmatprep.subr.mxu0 0.0
    %365 = vmatpush1.msra.mxu0 0.0
    %366 = vmatprep.subr.mxu0 0.0
    %367 = vmatpush1.msra.mxu0 0.0
    %368 = vmatprep.subr.mxu0 0.0
    %369 = vmatpush1.msra.mxu0 0.0
    %370 = vmatprep.subr.mxu0 0.0
    %371 = vmatpush1.msra.mxu0 0.0
    %372 = vmatprep.subr.mxu0 0.0
    %373 = vmatpush1.msra.mxu0 0.0
    %374 = vmatprep.subr.mxu0 0.0
    %375 = vmatpush1.msra.mxu0 0.0
    %376 = vmatprep.subr.mxu0 0.0
    %377 = vmatpush1.msra.mxu0 0.0
    %378 = vmatprep.subr.mxu0 0.0
    %379 = vmatpush1.msra.mxu0 0.0
    %380 = vmatprep.subr.mxu0 0.0
    %381 = vmatpush1.msra.mxu0 0.0
    %382 = vmatprep.subr.mxu0 0.0
    %383 = vmatpush1.msra.mxu0 0.0
    %384 = vmatprep.subr.mxu0 0.0
    %385 = vmatpush1.msra.mxu0 0.0
    %386 = vmatprep.subr.mxu0 0.0
    %387 = vmatpush1.msra.mxu0 0.0
    %388 = vmatprep.subr.mxu0 0.0
    %389 = vmatpush1.msra.mxu0 0.0
    %390 = vmatprep.subr.mxu0 0.0
    %391 = vmatpush1.msra.mxu0 0.0
    %392 = vmatprep.subr.mxu0 0.0
    %393 = vmatpush1.msra.mxu0 0.0
    %394 = vmatprep.subr.mxu0 0.0
    %395 = vmatpush1.msra.mxu0 0.0
    %396 = vmatprep.mubr.f32.mxu0 0.0
    %397 = vmatmul.mubr.f32.gmra.mrb[0].mxu0 %v245
    %v398 = vpop.f32.mrb[0].mxu0
    %v399 = vadd.f32 %v315, %v398
    %v400 = vpop.f32.mrb[0].mxu0
    %v401 = vadd.f32 %v319, %v400
    %402 = vdwg.mxu0
    %403 = vmatprep.subr.mxu0 %v249
    %404 = vmatpush1.msra.mxu0 %v248
    %405 = vmatprep.subr.mxu0 %v253
    %406 = vmatpush1.msra.mxu0 %v252
    %407 = vmatprep.subr.mxu0 %v257
    %408 = vmatpush1.msra.mxu0 %v256
    %409 = vmatprep.subr.mxu0 %v261
    %410 = vmatpush1.msra.mxu0 %v260
    %411 = vmatprep.subr.mxu0 %v265
    %412 = vmatpush1.msra.mxu0 %v264
    %413 = vmatprep.subr.mxu0 %v269
    %414 = vmatpush1.msra.mxu0 %v268
    %415 = vmatprep.subr.mxu0 %v273
    %416 = vmatpush1.msra.mxu0 %v272
    %417 = vmatprep.subr.mxu0 %v277
    %418 = vmatpush1.msra.mxu0 %v276
    %419 = vmatprep.subr.mxu0 %v281
    %420 = vmatpush1.msra.mxu0 %v280
    %421 = vmatprep.subr.mxu0 %v285
    %422 = vmatpush1.msra.mxu0 %v284
    %423 = vmatprep.subr.mxu0 %v289
    %424 = vmatpush1.msra.mxu0 %v288
    %425 = vmatprep.subr.mxu0 %v293
    %426 = vmatpush1.msra.mxu0 %v292
    %427 = vmatprep.subr.mxu0 %v297
    %428 = vmatpush1.msra.mxu0 %v296
    %429 = vmatprep.subr.mxu0 %v301
    %430 = vmatpush1.msra.mxu0 %v300
    %431 = vmatprep.subr.mxu0 %v305
    %432 = vmatpush1.msra.mxu0 %v304
    %433 = vmatprep.subr.mxu0 %v309
    %434 = vmatpush1.msra.mxu0 %v308
    %435 = vmatprep.subr.mxu0 0.0
    %436 = vmatpush1.msra.mxu0 0.0
    %437 = vmatprep.subr.mxu0 0.0
    %438 = vmatpush1.msra.mxu0 0.0
    %439 = vmatprep.subr.mxu0 0.0
    %440 = vmatpush1.msra.mxu0 0.0
    %441 = vmatprep.subr.mxu0 0.0
    %442 = vmatpush1.msra.mxu0 0.0
    %443 = vmatprep.subr.mxu0 0.0
    %444 = vmatpush1.msra.mxu0 0.0
    %445 = vmatprep.subr.mxu0 0.0
    %446 = vmatpush1.msra.mxu0 0.0
    %447 = vmatprep.subr.mxu0 0.0
    %448 = vmatpush1.msra.mxu0 0.0
    %449 = vmatprep.subr.mxu0 0.0
    %450 = vmatpush1.msra.mxu0 0.0
    %451 = vmatprep.subr.mxu0 0.0
    %452 = vmatpush1.msra.mxu0 0.0
    %453 = vmatprep.subr.mxu0 0.0
    %454 = vmatpush1.msra.mxu0 0.0
    %455 = vmatprep.subr.mxu0 0.0
    %456 = vmatpush1.msra.mxu0 0.0
    %457 = vmatprep.subr.mxu0 0.0
    %458 = vmatpush1.msra.mxu0 0.0
    %459 = vmatprep.subr.mxu0 0.0
    %460 = vmatpush1.msra.mxu0 0.0
    %461 = vmatprep.subr.mxu0 0.0
    %462 = vmatpush1.msra.mxu0 0.0
    %463 = vmatprep.subr.mxu0 0.0
    %464 = vmatpush1.msra.mxu0 0.0
    %465 = vmatprep.subr.mxu0 0.0
    %466 = vmatpush1.msra.mxu0 0.0
    %467 = vmatprep.mubr.f32.mxu0 0.0
    %468 = vmatmul.mubr.f32.gmra.mrb[0].mxu0 %v245
    %v469 = vpop.f32.mrb[0].mxu0
    %v470 = vadd.f32 %v323, %v469
    %v471 = vpop.f32.mrb[0].mxu0
    %v472 = vadd.f32 %v327, %v471
    %473 = vdwg.mxu0
    %v474 = vmul.f32 %v399, 0.5
    %v475 = vmul.f32 %v401, 0.5
    %v476 = vmul.f32 %v470, 0.5
    %v477 = vmul.f32 %v472, 0.5
    %v478 = vmul.f32 %v399, 0.70710677
    %v479 = vmul.f32 %v401, 0.70710677
    %v480 = vmul.f32 %v470, 0.70710677
    %v481 = vmul.f32 %v472, 0.70710677
    %v482 = verf.f32.pop %v478
    %v483 = verf.f32.pop %v479
    %v484 = verf.f32.pop %v480
    %v485 = verf.f32.pop %v481
    %v486 = vadd.f32 %v482, 1.0
    %v487 = vadd.f32 %v483, 1.0
    %v488 = vadd.f32 %v484, 1.0
    %v489 = vadd.f32 %v485, 1.0
    %v490 = vmul.f32 %v474, %v486
    %v491 = vmul.f32 %v475, %v487
    %v492 = vmul.f32 %v476, %v488
    %v493 = vmul.f32 %v477, %v489
    %v494 = vld [vmem:[#allocation5] sm:$0xff]
    %v495 = vld [vmem:[#allocation5 + $0x8] sm:$0xff]
    %v496 = vld [vmem:[#allocation5 + $0x10] sm:$0xff]
    %v497 = vld [vmem:[#allocation5 + $0x18] sm:$0xff]
    %v498 = vld [vmem:[#allocation5 + $0x20] sm:$0xff]
    %v499 = vld [vmem:[#allocation5 + $0x28] sm:$0xff]
    %v500 = vld [vmem:[#allocation5 + $0x30] sm:$0xff]
    %v501 = vld [vmem:[#allocation5 + $0x38] sm:$0xff]
    %v502 = vld [vmem:[#allocation5 + $0x40] sm:$0xff]
    %v503 = vld [vmem:[#allocation5 + $0x48] sm:$0xff]
    %v504 = vld [vmem:[#allocation5 + $0x50] sm:$0xff]
    %v505 = vld [vmem:[#allocation5 + $0x58] sm:$0xff]
    %v506 = vld [vmem:[#allocation5 + $0x60] sm:$0xff]
    %v507 = vld [vmem:[#allocation5 + $0x68] sm:$0xff]
    %v508 = vld [vmem:[#allocation5 + $0x70] sm:$0xff]
    %v509 = vld [vmem:[#allocation5 + $0x78] sm:$0xff]
    %v510 = vld [vmem:[#allocation5 + $0x80] sm:$0xff]
    %v511 = vld [vmem:[#allocation5 + $0x88] sm:$0xff]
    %v512 = vld [vmem:[#allocation5 + $0x90] sm:$0xff]
    %v513 = vld [vmem:[#allocation5 + $0x98] sm:$0xff]
    %v514 = vld [vmem:[#allocation5 + $0xa0] sm:$0xff]
    %v515 = vld [vmem:[#allocation5 + $0xa8] sm:$0xff]
    %v516 = vld [vmem:[#allocation5 + $0xb0] sm:$0xff]
    %v517 = vld [vmem:[#allocation5 + $0xb8] sm:$0xff]
    %v518 = vld [vmem:[#allocation5 + $0xc0] sm:$0xff]
    %v519 = vld [vmem:[#allocation5 + $0xc8] sm:$0xff]
    %v520 = vld [vmem:[#allocation5 + $0xd0] sm:$0xff]
    %v521 = vld [vmem:[#allocation5 + $0xd8] sm:$0xff]
    %v522 = vld [vmem:[#allocation5 + $0xe0] sm:$0xff]
    %v523 = vld [vmem:[#allocation5 + $0xe8] sm:$0xff]
    %v524 = vld [vmem:[#allocation5 + $0xf0] sm:$0xff]
    %v525 = vld [vmem:[#allocation5 + $0xf8] sm:$0xff]
    %v526 = vld [vmem:[#allocation5 + $0x100] sm:$0xff]
    %v527 = vld [vmem:[#allocation5 + $0x108] sm:$0xff]
    %v528 = vld [vmem:[#allocation5 + $0x110] sm:$0xff]
    %v529 = vld [vmem:[#allocation5 + $0x118] sm:$0xff]
    %v530 = vld [vmem:[#allocation5 + $0x120] sm:$0xff]
    %v531 = vld [vmem:[#allocation5 + $0x128] sm:$0xff]
    %v532 = vld [vmem:[#allocation5 + $0x130] sm:$0xff]
    %v533 = vld [vmem:[#allocation5 + $0x138] sm:$0xff]
    %v534 = vld [vmem:[#allocation5 + $0x140] sm:$0xff]
    %v535 = vld [vmem:[#allocation5 + $0x148] sm:$0xff]
    %v536 = vld [vmem:[#allocation5 + $0x150] sm:$0xff]
    %v537 = vld [vmem:[#allocation5 + $0x158] sm:$0xff]
    %v538 = vld [vmem:[#allocation5 + $0x160] sm:$0xff]
    %v539 = vld [vmem:[#allocation5 + $0x168] sm:$0xff]
    %v540 = vld [vmem:[#allocation5 + $0x170] sm:$0xff]
    %v541 = vld [vmem:[#allocation5 + $0x178] sm:$0xff]
    %v542 = vld [vmem:[#allocation5 + $0x180] sm:$0xff]
    %v543 = vld [vmem:[#allocation5 + $0x188] sm:$0xff]
    %v544 = vld [vmem:[#allocation5 + $0x190] sm:$0xff]
    %v545 = vld [vmem:[#allocation5 + $0x198] sm:$0xff]
    %v546 = vld [vmem:[#allocation5 + $0x1a0] sm:$0xff]
    %v547 = vld [vmem:[#allocation5 + $0x1a8] sm:$0xff]
    %v548 = vld [vmem:[#allocation5 + $0x1b0] sm:$0xff]
    %v549 = vld [vmem:[#allocation5 + $0x1b8] sm:$0xff]
    %v550 = vld [vmem:[#allocation5 + $0x1c0] sm:$0xff]
    %v551 = vld [vmem:[#allocation5 + $0x1c8] sm:$0xff]
    %v552 = vld [vmem:[#allocation5 + $0x1d0] sm:$0xff]
    %v553 = vld [vmem:[#allocation5 + $0x1d8] sm:$0xff]
    %v554 = vld [vmem:[#allocation5 + $0x1e0] sm:$0xff]
    %v555 = vld [vmem:[#allocation5 + $0x1e8] sm:$0xff]
    %v556 = vld [vmem:[#allocation5 + $0x1f0] sm:$0xff]
    %v557 = vld [vmem:[#allocation5 + $0x1f8] sm:$0xff]
    %v558 = vld [vmem:[%s6] sm:$0x1]
    %v560 = vlaneseq
    %v561 = vshrl.u32 %v560, 7
    %v562 = vsub.s32 0, %v561
    %v563 = vrot.slane %v558, %v562
    %565 = vmatprep.subr.mxu0 0.0
    %566 = vmatpush1.msra.mxu0 %v494
    %567 = vmatprep.subr.mxu0 0.0
    %568 = vmatpush1.msra.mxu0 %v495
    %569 = vmatprep.subr.mxu0 0.0
    %570 = vmatpush1.msra.mxu0 %v496
    %571 = vmatprep.subr.mxu0 0.0
    %572 = vmatpush1.msra.mxu0 %v497
    %573 = vmatprep.subr.mxu0 0.0
    %574 = vmatpush1.msra.mxu0 %v498
    %575 = vmatprep.subr.mxu0 0.0
    %576 = vmatpush1.msra.mxu0 %v499
    %577 = vmatprep.subr.mxu0 0.0
    %578 = vmatpush1.msra.mxu0 %v500
    %579 = vmatprep.subr.mxu0 0.0
    %580 = vmatpush1.msra.mxu0 %v501
    %581 = vmatprep.subr.mxu0 0.0
    %582 = vmatpush1.msra.mxu0 %v502
    %583 = vmatprep.subr.mxu0 0.0
    %584 = vmatpush1.msra.mxu0 %v503
    %585 = vmatprep.subr.mxu0 0.0
    %586 = vmatpush1.msra.mxu0 %v504
    %587 = vmatprep.subr.mxu0 0.0
    %588 = vmatpush1.msra.mxu0 %v505
    %589 = vmatprep.subr.mxu0 0.0
    %590 = vmatpush1.msra.mxu0 %v506
    %591 = vmatprep.subr.mxu0 0.0
    %592 = vmatpush1.msra.mxu0 %v507
    %593 = vmatprep.subr.mxu0 0.0
    %594 = vmatpush1.msra.mxu0 %v508
    %595 = vmatprep.subr.mxu0 0.0
    %596 = vmatpush1.msra.mxu0 %v509
    %597 = vmatprep.subr.mxu0 0.0
    %598 = vmatpush1.msra.mxu0 %v510
    %599 = vmatprep.subr.mxu0 0.0
    %600 = vmatpush1.msra.mxu0 %v511
    %601 = vmatprep.subr.mxu0 0.0
    %602 = vmatpush1.msra.mxu0 %v512
    %603 = vmatprep.subr.mxu0 0.0
    %604 = vmatpush1.msra.mxu0 %v513
    %605 = vmatprep.subr.mxu0 0.0
    %606 = vmatpush1.msra.mxu0 %v514
    %607 = vmatprep.subr.mxu0 0.0
    %608 = vmatpush1.msra.mxu0 %v515
    %609 = vmatprep.subr.mxu0 0.0
    %610 = vmatpush1.msra.mxu0 %v516
    %611 = vmatprep.subr.mxu0 0.0
    %612 = vmatpush1.msra.mxu0 %v517
    %613 = vmatprep.subr.mxu0 0.0
    %614 = vmatpush1.msra.mxu0 %v518
    %615 = vmatprep.subr.mxu0 0.0
    %616 = vmatpush1.msra.mxu0 %v519
    %617 = vmatprep.subr.mxu0 0.0
    %618 = vmatpush1.msra.mxu0 %v520
    %619 = vmatprep.subr.mxu0 0.0
    %620 = vmatpush1.msra.mxu0 %v521
    %621 = vmatprep.subr.mxu0 0.0
    %622 = vmatpush1.msra.mxu0 %v522
    %623 = vmatprep.subr.mxu0 0.0
    %624 = vmatpush1.msra.mxu0 %v523
    %625 = vmatprep.subr.mxu0 0.0
    %626 = vmatpush1.msra.mxu0 %v524
    %627 = vmatprep.subr.mxu0 0.0
    %628 = vmatpush1.msra.mxu0 %v525
    %629 = vmatprep.mubr.f32.mxu0 %v491
    %630 = vmatmul.mubr.f32.gmra.mrb[0].mxu0 %v490
    %v631 = vpop.f32.mrb[0].mxu0
    %v632 = vadd.f32 %v563, %v631
    %v633 = vpop.f32.mrb[0].mxu0
    %634 = vdwg.mxu0
    %635 = vmatprep.subr.mxu0 0.0
    %636 = vmatpush1.msra.mxu0 %v526
    %637 = vmatprep.subr.mxu0 0.0
    %638 = vmatpush1.msra.mxu0 %v527
    %639 = vmatprep.subr.mxu0 0.0
    %640 = vmatpush1.msra.mxu0 %v528
    %641 = vmatprep.subr.mxu0 0.0
    %642 = vmatpush1.msra.mxu0 %v529
    %643 = vmatprep.subr.mxu0 0.0
    %644 = vmatpush1.msra.mxu0 %v530
    %645 = vmatprep.subr.mxu0 0.0
    %646 = vmatpush1.msra.mxu0 %v531
    %647 = vmatprep.subr.mxu0 0.0
    %648 = vmatpush1.msra.mxu0 %v532
    %649 = vmatprep.subr.mxu0 0.0
    %650 = vmatpush1.msra.mxu0 %v533
    %651 = vmatprep.subr.mxu0 0.0
    %652 = vmatpush1.msra.mxu0 %v534
    %653 = vmatprep.subr.mxu0 0.0
    %654 = vmatpush1.msra.mxu0 %v535
    %655 = vmatprep.subr.mxu0 0.0
    %656 = vmatpush1.msra.mxu0 %v536
    %657 = vmatprep.subr.mxu0 0.0
    %658 = vmatpush1.msra.mxu0 %v537
    %659 = vmatprep.subr.mxu0 0.0
    %660 = vmatpush1.msra.mxu0 %v538
    %661 = vmatprep.subr.mxu0 0.0
    %662 = vmatpush1.msra.mxu0 %v539
    %663 = vmatprep.subr.mxu0 0.0
    %664 = vmatpush1.msra.mxu0 %v540
    %665 = vmatprep.subr.mxu0 0.0
    %666 = vmatpush1.msra.mxu0 %v541
    %667 = vmatprep.subr.mxu0 0.0
    %668 = vmatpush1.msra.mxu0 %v542
    %669 = vmatprep.subr.mxu0 0.0
    %670 = vmatpush1.msra.mxu0 %v543
    %671 = vmatprep.subr.mxu0 0.0
    %672 = vmatpush1.msra.mxu0 %v544
    %673 = vmatprep.subr.mxu0 0.0
    %674 = vmatpush1.msra.mxu0 %v545
    %675 = vmatprep.subr.mxu0 0.0
    %676 = vmatpush1.msra.mxu0 %v546
    %677 = vmatprep.subr.mxu0 0.0
    %678 = vmatpush1.msra.mxu0 %v547
    %679 = vmatprep.subr.mxu0 0.0
    %680 = vmatpush1.msra.mxu0 %v548
    %681 = vmatprep.subr.mxu0 0.0
    %682 = vmatpush1.msra.mxu0 %v549
    %683 = vmatprep.subr.mxu0 0.0
    %684 = vmatpush1.msra.mxu0 %v550
    %685 = vmatprep.subr.mxu0 0.0
    %686 = vmatpush1.msra.mxu0 %v551
    %687 = vmatprep.subr.mxu0 0.0
    %688 = vmatpush1.msra.mxu0 %v552
    %689 = vmatprep.subr.mxu0 0.0
    %690 = vmatpush1.msra.mxu0 %v553
    %691 = vmatprep.subr.mxu0 0.0
    %692 = vmatpush1.msra.mxu0 %v554
    %693 = vmatprep.subr.mxu0 0.0
    %694 = vmatpush1.msra.mxu0 %v555
    %695 = vmatprep.subr.mxu0 0.0
    %696 = vmatpush1.msra.mxu0 %v556
    %697 = vmatprep.subr.mxu0 0.0
    %698 = vmatpush1.msra.mxu0 %v557
    %699 = vmatprep.mubr.f32.mxu0 %v493
    %700 = vmatmul.mubr.f32.gmra.mrb[0].mxu0 %v492
    %v701 = vpop.f32.mrb[0].mxu0
    %v702 = vadd.f32 %v632, %v701
    %v703 = vpop.f32.mrb[0].mxu0
    %704 = vdwg.mxu0
    %705 = vst [vmem:[#allocation7] sm:$0xff] %v702
    // Predicated region
    $region38: #{tpu_custom_call.1} parent=1 // pred_check
      _
    $region39: #{tpu_custom_call.1} parent=1 // pred_check_branch
      %707 = sbr.rel (0) target = $region41
    $region40: #{tpu_custom_call.1} parent=1 // pred_region
      %s709 = ssub.s32 128, 128
      %710 = vsyncadd [#allocation4], %s709
      %s712 = sshll.u32 [#allocation7], 4
      %s713 = int_to_ptr.vmem [resolvable:$true] %s712
      %715 = dma.vmem_to_hbm [thread:$0]  %s713, 128, %s7, [#allocation4]
    $region41: #{tpu_custom_call.1} parent=1 // pred_fallthru
      _
    // Predicated region
    $region42: #{tpu_custom_call.1} parent=1 // pred_check
      _
    $region43: #{tpu_custom_call.1} parent=1 // pred_check_branch
      %717 = sbr.rel (0) target = $region45
    $region44: #{tpu_custom_call.1} parent=1 // pred_region
      %718 = dma.done [#allocation4], 128
    $region45: #{tpu_custom_call.1} parent=1 // pred_fallthru
      _
    %719 = vsyncpa [#allocation3], 1
    %720 = vsyncpa [#allocation6], 1
    %721 = vsyncpa [#allocation4], 1

</llo_original>
